<compile_context>
chip_gen: v6e
topology: v6e:2x2x1
jax: 0.10.0
libtpu: 0.0.40
codegen_flags: <defaults>
</compile_context>

<pallas_src>
import numpy as np
import jax
import jax.numpy as jnp
from jax.experimental import pallas as pl
from jax.experimental.pallas import tpu as pltpu

# ---- module hyper-parameters (the PyTorch file leaves these two undefined;
#      we pick small, consistent values) ----
latent_dimensions = 8
data_sequence_size = 16

convolution_channel_size_1 = 4
convolution_channel_size_2 = 4
convolution_channel_size_3 = 4
convolution_kernel = 3
fully_connected_unit_size = 400

BATCH = 2
IN_DIM = 4 * latent_dimensions                              # fc_lat input (32)
FC1_OUT = convolution_channel_size_1 * data_sequence_size   # 64

SUBLANE = 8
H_LAT = 512          # fc_lat width 400 padded to a 128-lane multiple
H_CONV = 128         # 64-wide fc1 / conv slabs padded to a full lane tile


def decoder_kernel(z_ref, wlat_ref, w1_ref, t1_ref, t2_ref, t3_ref,
                   bias_ref, out_ref):
    # Static, lane-aligned slices of the stacked bias rows (free).
    blat = bias_ref[0:1, :]            # (1, 512)
    b1 = bias_ref[1:2, 0:H_CONV]       # (1, 128)
    tb1 = bias_ref[2:3, 0:H_CONV]
    tb2 = bias_ref[3:4, 0:H_CONV]
    tb3 = bias_ref[4:5, 0:H_CONV]

    # fc_lat + ReLU                          (TM, 32) @ (32, 512) -> (TM, 512)
    h = jnp.dot(z_ref[...], wlat_ref[...],
                preferred_element_type=jnp.float32) + blat
    h = jnp.maximum(h, 0.0)
    # fc1 + ReLU                            (TM, 512) @ (512, 128) -> (TM, 128)
    h = jnp.dot(h, w1_ref[...], preferred_element_type=jnp.float32) + b1
    h = jnp.maximum(h, 0.0)
    # conv1 ('same') as Toeplitz matmul + bias + ReLU          (TM, 128)
    h = jnp.dot(h, t1_ref[...], preferred_element_type=jnp.float32) + tb1
    h = jnp.maximum(h, 0.0)
    # conv2
    h = jnp.dot(h, t2_ref[...], preferred_element_type=jnp.float32) + tb2
    h = jnp.maximum(h, 0.0)
    # conv3 -> (TM, 128); only the first data_sequence_size cols are real
    h = jnp.dot(h, t3_ref[...], preferred_element_type=jnp.float32) + tb3
    out_ref[...] = jnp.maximum(h, 0.0)


def _conv_to_toeplitz(cw, cb, S, in_rows, out_cols):
    """Lower a 'same' (pad=K//2, stride=1) Conv1d to a dense (in_rows,
    out_cols) matrix acting on a channel-major flattened (B, Cin*S) slab,
    plus an (out_cols,) bias row.  Zero padding (both the conv's boundary
    padding and the lane padding) is baked into the band structure."""
    cw = np.asarray(cw, np.float32)
    cb = np.asarray(cb, np.float32)
    Cout, Cin, K = cw.shape
    T = np.zeros((in_rows, out_cols), np.float32)
    b = np.zeros((out_cols,), np.float32)
    pad = K // 2
    for o in range(Cout):
        for t in range(S):
            col = o * S + t
            b[col] = cb[o]
            for c in range(Cin):
                for k in range(K):
                    src = t + k - pad
                    if 0 <= src < S:
                        T[c * S + src, col] = cw[o, c, k]
    return T, b


def prepare_params(params):
    """One-time host-side lowering + lane padding of the raw parameters."""
    (wlat, blat, w1, b1, cw1, cb1, cw2, cb2, cw3, cb3) = params
    S = data_sequence_size

    # fc_lat: (IN_DIM, 400) -> (IN_DIM, 512)
    wlat_p = np.zeros((IN_DIM, H_LAT), np.float32)
    wlat_p[:, :fully_connected_unit_size] = np.asarray(wlat, np.float32)

    # fc1: (400, 64) -> (512, 128)
    w1_p = np.zeros((H_LAT, H_CONV), np.float32)
    w1_p[:fully_connected_unit_size, :FC1_OUT] = np.asarray(w1, np.float32)

    # conv Toeplitz matrices, all padded to (128, 128)
    t1, tb1 = _conv_to_toeplitz(cw1, cb1, S, H_CONV, H_CONV)
    t2, tb2 = _conv_to_toeplitz(cw2, cb2, S, H_CONV, H_CONV)
    t3, tb3 = _conv_to_toeplitz(cw3, cb3, S, H_CONV, H_CONV)

    # Stack all five bias rows into one (8, 512) slab (one bias per sublane).
    bias = np.zeros((SUBLANE, H_LAT), np.float32)
    bias[0, :fully_connected_unit_size] = np.asarray(blat, np.float32).reshape(-1)
    bias[1, :FC1_OUT] = np.asarray(b1, np.float32).reshape(-1)
    bias[2, :H_CONV] = tb1
    bias[3, :H_CONV] = tb2
    bias[4, :H_CONV] = tb3

    return tuple(jnp.asarray(a) for a in (wlat_p, w1_p, t1, t2, t3, bias))


def prediction_decoder_velocity(z, prepared):
    wlat, w1, t1, t2, t3, bias = prepared
    B = z.shape[0]
    S = data_sequence_size

    # Pad batch to the f32 sublane count; for large batches round up to a
    # full MXU M-tile and iterate a 1-D batch grid.
    Bp = ((B + SUBLANE - 1) // SUBLANE) * SUBLANE
    if Bp >= 256:
        TM = 256
        Bp = ((Bp + TM - 1) // TM) * TM
    else:
        TM = Bp
    if Bp != B:
        z = jnp.pad(z, ((0, Bp - B), (0, 0)))

    def resident(shape):
        # Weight/bias blocks: same block every grid step -> stays VMEM-resident.
        return pl.BlockSpec(shape, lambda i: (0, 0))

    out = pl.pallas_call(
        decoder_kernel,
        out_shape=jax.ShapeDtypeStruct((Bp, H_CONV), jnp.float32),
        grid=(Bp // TM,),
        in_specs=[
            pl.BlockSpec((TM, IN_DIM), lambda i: (i, 0)),   # z (batch-tiled)
            resident((IN_DIM, H_LAT)),                      # wlat
            resident((H_LAT, H_CONV)),                      # w1
            resident((H_CONV, H_CONV)),                     # t1
            resident((H_CONV, H_CONV)),                     # t2
            resident((H_CONV, H_CONV)),                     # t3
            resident((SUBLANE, H_LAT)),                     # stacked biases
        ],
        out_specs=pl.BlockSpec((TM, H_CONV), lambda i: (i, 0)),
        compiler_params=pltpu.CompilerParams(
            dimension_semantics=("parallel",)),
    )(z, wlat, w1, t1, t2, t3, bias)

    # Slice away batch padding + lane padding; match PyTorch (B, 1, L).
    return out[:B, :S].reshape(B, 1, S)


# ---------------- plain-JAX reference for validation ----------------
def reference(z, params):
    (wlat, blat, w1, b1, cw1, cb1, cw2, cb2, cw3, cb3) = params
    h = jax.nn.relu(z @ wlat + blat)
    h = jax.nn.relu(h @ w1 + b1)
    x = h.reshape(z.shape[0], convolution_channel_size_1, data_sequence_size)

    def conv(x, w, b):
        y = jax.lax.conv_general_dilated(
            x, w, window_strides=(1,), padding=((1, 1),),
            dimension_numbers=('NCH', 'OIH', 'NCH'))
        return y + b[None, :, None]

    x = jax.nn.relu(conv(x, cw1, cb1))
    x = jax.nn.relu(conv(x, cw2, cb2))
    x = jax.nn.relu(conv(x, cw3, cb3))
    return x


def make_params(key):
    ks = jax.random.split(key, 10)
    f32 = jnp.float32
    wlat = 0.1 * jax.random.normal(ks[0], (IN_DIM, fully_connected_unit_size), f32)
    blat = 0.1 * jax.random.normal(ks[1], (1, fully_connected_unit_size), f32)
    w1 = 0.1 * jax.random.normal(ks[2], (fully_connected_unit_size, FC1_OUT), f32)
    b1 = 0.1 * jax.random.normal(ks[3], (1, FC1_OUT), f32)
    cw1 = 0.2 * jax.random.normal(
        ks[4], (convolution_channel_size_2, convolution_channel_size_1,
                convolution_kernel), f32)
    cb1 = 0.1 * jax.random.normal(ks[5], (convolution_channel_size_2,), f32)
    cw2 = 0.2 * jax.random.normal(
        ks[6], (convolution_channel_size_3, convolution_channel_size_2,
                convolution_kernel), f32)
    cb2 = 0.1 * jax.random.normal(ks[7], (convolution_channel_size_3,), f32)
    cw3 = 0.2 * jax.random.normal(
        ks[8], (1, convolution_channel_size_3, convolution_kernel), f32)
    cb3 = 0.1 * jax.random.normal(ks[9], (1,), f32)
    return (wlat, blat, w1, b1, cw1, cb1, cw2, cb2, cw3, cb3)


if __name__ == "__main__":
    key = jax.random.PRNGKey(0)
    k_z, k_p = jax.random.split(key)
    z = jax.random.normal(k_z, (BATCH, IN_DIM), jnp.float32)
    params = make_params(k_p)

    prepared = prepare_params(params)          # one-time host-side lowering
    out = prediction_decoder_velocity(z, prepared)
    out = jax.block_until_ready(out)

    ref = reference(z, params)
    assert out.shape == (BATCH, 1, data_sequence_size), out.shape
    assert jnp.allclose(out, ref, atol=1e-3, rtol=1e-3), \
        float(jnp.max(jnp.abs(out - ref)))

    print("KERNEL_OK")
</pallas_src>

<mosaic_0001>
module attributes {stable_mosaic.version = 11 : i64} {
  func.func @decoder_kernel(%arg0: i32, %arg1: memref<8x32xf32, #tpu.memory_space<vmem>>, %arg2: memref<32x512xf32, #tpu.memory_space<vmem>>, %arg3: memref<512x128xf32, #tpu.memory_space<vmem>>, %arg4: memref<128x128xf32, #tpu.memory_space<vmem>>, %arg5: memref<128x128xf32, #tpu.memory_space<vmem>>, %arg6: memref<128x128xf32, #tpu.memory_space<vmem>>, %arg7: memref<8x512xf32, #tpu.memory_space<vmem>>, %arg8: memref<8x128xf32, #tpu.memory_space<vmem>>) attributes {dimension_semantics = [#tpu.dimension_semantics<parallel>], iteration_bounds = array<i64: 1>, scalar_prefetch = 0 : i64, scratch_operands = 0 : i64, tpu.core_type = #tpu.core_type<tc>, window_params = [{transform_indices = @transform_0, window_bounds = array<i64: 8, 32>}, {pipeline_mode = #tpu.pipeline_mode<synchronous>, transform_indices = @transform_1, window_bounds = array<i64: 32, 512>}, {pipeline_mode = #tpu.pipeline_mode<synchronous>, transform_indices = @transform_2, window_bounds = array<i64: 512, 128>}, {pipeline_mode = #tpu.pipeline_mode<synchronous>, transform_indices = @transform_3, window_bounds = array<i64: 128, 128>}, {pipeline_mode = #tpu.pipeline_mode<synchronous>, transform_indices = @transform_4, window_bounds = array<i64: 128, 128>}, {pipeline_mode = #tpu.pipeline_mode<synchronous>, transform_indices = @transform_5, window_bounds = array<i64: 128, 128>}, {pipeline_mode = #tpu.pipeline_mode<synchronous>, transform_indices = @transform_6, window_bounds = array<i64: 8, 512>}, {transform_indices = @transform_7, window_bounds = array<i64: 8, 128>}]} {
    %c0 = arith.constant 0 : index
    %c0_0 = arith.constant 0 : index
    %0 = vector.load %arg7[%c0, %c0_0] : memref<8x512xf32, #tpu.memory_space<vmem>>, vector<1x512xf32>
    %c1 = arith.constant 1 : index
    %c0_1 = arith.constant 0 : index
    %1 = vector.load %arg7[%c1, %c0_1] : memref<8x512xf32, #tpu.memory_space<vmem>>, vector<1x128xf32>
    %c2 = arith.constant 2 : index
    %c0_2 = arith.constant 0 : index
    %2 = vector.load %arg7[%c2, %c0_2] : memref<8x512xf32, #tpu.memory_space<vmem>>, vector<1x128xf32>
    %c3 = arith.constant 3 : index
    %c0_3 = arith.constant 0 : index
    %3 = vector.load %arg7[%c3, %c0_3] : memref<8x512xf32, #tpu.memory_space<vmem>>, vector<1x128xf32>
    %c4 = arith.constant 4 : index
    %c0_4 = arith.constant 0 : index
    %4 = vector.load %arg7[%c4, %c0_4] : memref<8x512xf32, #tpu.memory_space<vmem>>, vector<1x128xf32>
    %c0_5 = arith.constant 0 : index
    %c0_6 = arith.constant 0 : index
    %5 = vector.load %arg1[%c0_5, %c0_6] : memref<8x32xf32, #tpu.memory_space<vmem>>, vector<8x32xf32>
    %c0_7 = arith.constant 0 : index
    %c0_8 = arith.constant 0 : index
    %6 = vector.load %arg2[%c0_7, %c0_8] : memref<32x512xf32, #tpu.memory_space<vmem>>, vector<32x512xf32>
    %cst = arith.constant dense<0.000000e+00> : vector<8x512xf32>
    %7 = tpu.matmul %5, %6, %cst {dimension_numbers = #tpu.dot_dimension_numbers<[1], [0], [0], [1], [0, 0, 1, 1], [], []>} : vector<8x32xf32>, vector<32x512xf32>, vector<8x512xf32> -> vector<8x512xf32>
    %8 = vector.broadcast %0 : vector<1x512xf32> to vector<8x512xf32>
    %9 = arith.addf %7, %8 : vector<8x512xf32>
    %cst_9 = arith.constant 0.000000e+00 : f32
    %10 = vector.broadcast %cst_9 : f32 to vector<8x512xf32>
    %11 = arith.maximumf %9, %10 : vector<8x512xf32>
    %c0_10 = arith.constant 0 : index
    %c0_11 = arith.constant 0 : index
    %12 = vector.load %arg3[%c0_10, %c0_11] : memref<512x128xf32, #tpu.memory_space<vmem>>, vector<512x128xf32>
    %cst_12 = arith.constant dense<0.000000e+00> : vector<8x128xf32>
    %13 = tpu.matmul %11, %12, %cst_12 {dimension_numbers = #tpu.dot_dimension_numbers<[1], [0], [0], [1], [0, 0, 1, 1], [], []>} : vector<8x512xf32>, vector<512x128xf32>, vector<8x128xf32> -> vector<8x128xf32>
    %14 = vector.broadcast %1 : vector<1x128xf32> to vector<8x128xf32>
    %15 = arith.addf %13, %14 : vector<8x128xf32>
    %cst_13 = arith.constant 0.000000e+00 : f32
    %16 = vector.broadcast %cst_13 : f32 to vector<8x128xf32>
    %17 = arith.maximumf %15, %16 : vector<8x128xf32>
    %c0_14 = arith.constant 0 : index
    %c0_15 = arith.constant 0 : index
    %18 = vector.load %arg4[%c0_14, %c0_15] : memref<128x128xf32, #tpu.memory_space<vmem>>, vector<128x128xf32>
    %cst_16 = arith.constant dense<0.000000e+00> : vector<8x128xf32>
    %19 = tpu.matmul %17, %18, %cst_16 {dimension_numbers = #tpu.dot_dimension_numbers<[1], [0], [0], [1], [0, 0, 1, 1], [], []>} : vector<8x128xf32>, vector<128x128xf32>, vector<8x128xf32> -> vector<8x128xf32>
    %20 = vector.broadcast %2 : vector<1x128xf32> to vector<8x128xf32>
    %21 = arith.addf %19, %20 : vector<8x128xf32>
    %cst_17 = arith.constant 0.000000e+00 : f32
    %22 = vector.broadcast %cst_17 : f32 to vector<8x128xf32>
    %23 = arith.maximumf %21, %22 : vector<8x128xf32>
    %c0_18 = arith.constant 0 : index
    %c0_19 = arith.constant 0 : index
    %24 = vector.load %arg5[%c0_18, %c0_19] : memref<128x128xf32, #tpu.memory_space<vmem>>, vector<128x128xf32>
    %cst_20 = arith.constant dense<0.000000e+00> : vector<8x128xf32>
    %25 = tpu.matmul %23, %24, %cst_20 {dimension_numbers = #tpu.dot_dimension_numbers<[1], [0], [0], [1], [0, 0, 1, 1], [], []>} : vector<8x128xf32>, vector<128x128xf32>, vector<8x128xf32> -> vector<8x128xf32>
    %26 = vector.broadcast %3 : vector<1x128xf32> to vector<8x128xf32>
    %27 = arith.addf %25, %26 : vector<8x128xf32>
    %cst_21 = arith.constant 0.000000e+00 : f32
    %28 = vector.broadcast %cst_21 : f32 to vector<8x128xf32>
    %29 = arith.maximumf %27, %28 : vector<8x128xf32>
    %c0_22 = arith.constant 0 : index
    %c0_23 = arith.constant 0 : index
    %30 = vector.load %arg6[%c0_22, %c0_23] : memref<128x128xf32, #tpu.memory_space<vmem>>, vector<128x128xf32>
    %cst_24 = arith.constant dense<0.000000e+00> : vector<8x128xf32>
    %31 = tpu.matmul %29, %30, %cst_24 {dimension_numbers = #tpu.dot_dimension_numbers<[1], [0], [0], [1], [0, 0, 1, 1], [], []>} : vector<8x128xf32>, vector<128x128xf32>, vector<8x128xf32> -> vector<8x128xf32>
    %32 = vector.broadcast %4 : vector<1x128xf32> to vector<8x128xf32>
    %33 = arith.addf %31, %32 : vector<8x128xf32>
    %cst_25 = arith.constant 0.000000e+00 : f32
    %34 = vector.broadcast %cst_25 : f32 to vector<8x128xf32>
    %35 = arith.maximumf %33, %34 : vector<8x128xf32>
    %c0_26 = arith.constant 0 : index
    %c0_27 = arith.constant 0 : index
    %36 = vector.load %arg8[%c0_26, %c0_27] : memref<8x128xf32, #tpu.memory_space<vmem>>, vector<8x128xf32>
    tpu.vector_store %arg8[%c0_26, %c0_27], %35 {strides = array<i32>} : memref<8x128xf32, #tpu.memory_space<vmem>>, vector<8x128xf32>,
    return
  }
  func.func @transform_0(%arg0: i32) -> (i32, i32) {
    %c0_i32 = arith.constant 0 : i32
    %c0_i32_0 = arith.constant 0 : i32
    return %arg0, %c0_i32 : i32, i32
  }
  func.func @transform_1(%arg0: i32) -> (i32, i32) {
    %c0_i32 = arith.constant 0 : i32
    %c0_i32_0 = arith.constant 0 : i32
    %c0_i32_1 = arith.constant 0 : i32
    return %c0_i32, %c0_i32_0 : i32, i32
  }
  func.func @transform_2(%arg0: i32) -> (i32, i32) {
    %c0_i32 = arith.constant 0 : i32
    %c0_i32_0 = arith.constant 0 : i32
    %c0_i32_1 = arith.constant 0 : i32
    return %c0_i32, %c0_i32_0 : i32, i32
  }
  func.func @transform_3(%arg0: i32) -> (i32, i32) {
    %c0_i32 = arith.constant 0 : i32
    %c0_i32_0 = arith.constant 0 : i32
    %c0_i32_1 = arith.constant 0 : i32
    return %c0_i32, %c0_i32_0 : i32, i32
  }
  func.func @transform_4(%arg0: i32) -> (i32, i32) {
    %c0_i32 = arith.constant 0 : i32
    %c0_i32_0 = arith.constant 0 : i32
    %c0_i32_1 = arith.constant 0 : i32
    return %c0_i32, %c0_i32_0 : i32, i32
  }
  func.func @transform_5(%arg0: i32) -> (i32, i32) {
    %c0_i32 = arith.constant 0 : i32
    %c0_i32_0 = arith.constant 0 : i32
    %c0_i32_1 = arith.constant 0 : i32
    return %c0_i32, %c0_i32_0 : i32, i32
  }
  func.func @transform_6(%arg0: i32) -> (i32, i32) {
    %c0_i32 = arith.constant 0 : i32
    %c0_i32_0 = arith.constant 0 : i32
    %c0_i32_1 = arith.constant 0 : i32
    return %c0_i32, %c0_i32_0 : i32, i32
  }
  func.func @transform_7(%arg0: i32) -> (i32, i32) {
    %c0_i32 = arith.constant 0 : i32
    %c0_i32_0 = arith.constant 0 : i32
    return %arg0, %c0_i32 : i32, i32
  }
}

</mosaic_0001>

<llo_original>
// kernel: tpu_custom_call.1
$region0: #{tpu_custom_call.1}
  #allocation0 [shape = 'u32[]', space=smem, size = 0x4, offset = 0x4, fixed_abs, tag = 'smem constant byte address 0x4 - core index']
  #allocation1 [shape = 'u32[144,128]{1,0:T(1,128)}', space=vmem, size = 0x12000, scoped, tag = 'internal scratch']
  %s0 = inlined_call_operand.hbm [shape: f32[8,32], index: 0, kind: input, shape index: {}]
  %s1 = inlined_call_operand.hbm [shape: f32[32,512], index: 1, kind: input, shape index: {}]
  %s2 = inlined_call_operand.hbm [shape: f32[512,128], index: 2, kind: input, shape index: {}]
  %s3 = inlined_call_operand.hbm [shape: f32[128,128], index: 3, kind: input, shape index: {}]
  %s4 = inlined_call_operand.hbm [shape: f32[128,128], index: 4, kind: input, shape index: {}]
  %s5 = inlined_call_operand.hbm [shape: f32[128,128], index: 5, kind: input, shape index: {}]
  %s6 = inlined_call_operand.hbm [shape: f32[8,512], index: 6, kind: input, shape index: {}]
  %s7 = inlined_call_operand.hbm [shape: f32[8,128], index: 7, kind: output, shape index: {}]
  %s8 = sld [smem:[#allocation0]]
  $region66: #{tpu_custom_call.1} parent=0
    _
  %s10 = ssub.s32 1, %s8
  %s11 = scalar_select 0, %s10, %s8
  $region1: #{tpu_custom_call.1} parent=0
    #allocation2 [shape = 'u8[4096]{0}', space=vmem, size = 0x1000, scoped, tag = 'input window, operand 0, single buffered']
    #allocation3 [shape = 's32[1]{0}', space=sflag, size = 0x4, scoped, tag = 'scoped memory for tpu_custom_call.1']
    #allocation4 [shape = 's32[1]{0}', space=sflag, size = 0x4, scoped, tag = 'scoped memory for tpu_custom_call.1']
    #allocation5 [shape = 'u8[65536]{0}', space=vmem, size = 0x10000, scoped, tag = 'input window, operand 1, single buffered']
    #allocation6 [shape = 's32[1]{0}', space=sflag, size = 0x4, scoped, tag = 'scoped memory for tpu_custom_call.1']
    #allocation7 [shape = 'u8[262144]{0}', space=vmem, size = 0x40000, scoped, tag = 'input window, operand 2, single buffered']
    #allocation8 [shape = 'u8[65536]{0}', space=vmem, size = 0x10000, scoped, tag = 'input window, operand 3, single buffered']
    #allocation9 [shape = 's32[1]{0}', space=sflag, size = 0x4, scoped, tag = 'scoped memory for tpu_custom_call.1']
    #allocation10 [shape = 'u8[65536]{0}', space=vmem, size = 0x10000, scoped, tag = 'input window, operand 4, single buffered']
    #allocation11 [shape = 'u8[65536]{0}', space=vmem, size = 0x10000, scoped, tag = 'input window, operand 5, single buffered']
    #allocation12 [shape = 's32[1]{0}', space=sflag, size = 0x4, scoped, tag = 'scoped memory for tpu_custom_call.1']
    #allocation13 [shape = 'u8[16384]{0}', space=vmem, size = 0x4000, scoped, tag = 'input window, operand 6, single buffered']
    #allocation14 [shape = 'u8[4096]{0}', space=vmem, size = 0x1000, scoped, tag = 'output window, operand 0, single buffered']
    %12 = vsyncpa [#allocation3], 0
    %13 = vsyncpa [#allocation6], 0
    %14 = vsyncpa [#allocation9], 0
    %15 = vsyncpa [#allocation12], 0
    %16 = vsyncpa [#allocation4], 0
    // Predicated region
    $region2: #{tpu_custom_call.1} parent=1 // pred_check
      _
    $region3: #{tpu_custom_call.1} parent=1 // pred_check_branch
      %18 = sbr.rel (0) target = $region5
    $region4: #{tpu_custom_call.1} parent=1 // pred_region
      %s20 = ssub.s32 128, 128
      %21 = vsyncadd [#allocation3], %s20
      %s23 = sshll.u32 [#allocation2], 4
      %s24 = int_to_ptr.vmem [resolvable:$true] %s23
      %26 = dma.hbm_to_vmem [thread:$0]  %s0, 128, %s24, [#allocation3]
    $region5: #{tpu_custom_call.1} parent=1 // pred_fallthru
      _
    // Predicated region
    $region6: #{tpu_custom_call.1} parent=1 // pred_check
      _
    $region7: #{tpu_custom_call.1} parent=1 // pred_check_branch
      %28 = sbr.rel (0) target = $region9
    $region8: #{tpu_custom_call.1} parent=1 // pred_region
      %s30 = ssub.s32 2048, 2048
      %31 = vsyncadd [#allocation6], %s30
      %s32 = sshll.u32 [#allocation5], 4
      %s33 = int_to_ptr.vmem [resolvable:$true] %s32
      %38 = dma.hbm_to_vmem [thread:$0]  %s1, 2048, %s33, [#allocation6], 512, 512, 32
    $region9: #{tpu_custom_call.1} parent=1 // pred_fallthru
      _
    // Predicated region
    $region10: #{tpu_custom_call.1} parent=1 // pred_check
      _
    $region11: #{tpu_custom_call.1} parent=1 // pred_check_branch
      %40 = sbr.rel (0) target = $region13
    $region12: #{tpu_custom_call.1} parent=1 // pred_region
      %s42 = ssub.s32 8192, 8192
      %43 = vsyncadd [#allocation6], %s42
      %s44 = sshll.u32 [#allocation7], 4
      %s45 = int_to_ptr.vmem [resolvable:$true] %s44
      %50 = dma.hbm_to_vmem [thread:$0]  %s2, 8192, %s45, [#allocation6], 128, 128, 8
    $region13: #{tpu_custom_call.1} parent=1 // pred_fallthru
      _
    // Predicated region
    $region14: #{tpu_custom_call.1} parent=1 // pred_check
      _
    $region15: #{tpu_custom_call.1} parent=1 // pred_check_branch
      %52 = sbr.rel (0) target = $region17
    $region16: #{tpu_custom_call.1} parent=1 // pred_region
      %s54 = ssub.s32 2048, 2048
      %55 = vsyncadd [#allocation9], %s54
      %s56 = sshll.u32 [#allocation8], 4
      %s57 = int_to_ptr.vmem [resolvable:$true] %s56
      %62 = dma.hbm_to_vmem [thread:$0]  %s3, 2048, %s57, [#allocation9], 128, 128, 8
    $region17: #{tpu_custom_call.1} parent=1 // pred_fallthru
      _
    // Predicated region
    $region18: #{tpu_custom_call.1} parent=1 // pred_check
      _
    $region19: #{tpu_custom_call.1} parent=1 // pred_check_branch
      %64 = sbr.rel (0) target = $region21
    $region20: #{tpu_custom_call.1} parent=1 // pred_region
      %s66 = ssub.s32 2048, 2048
      %67 = vsyncadd [#allocation9], %s66
      %s68 = sshll.u32 [#allocation10], 4
      %s69 = int_to_ptr.vmem [resolvable:$true] %s68
      %74 = dma.hbm_to_vmem [thread:$0]  %s4, 2048, %s69, [#allocation9], 128, 128, 8
    $region21: #{tpu_custom_call.1} parent=1 // pred_fallthru
      _
    // Predicated region
    $region22: #{tpu_custom_call.1} parent=1 // pred_check
      _
    $region23: #{tpu_custom_call.1} parent=1 // pred_check_branch
      %76 = sbr.rel (0) target = $region25
    $region24: #{tpu_custom_call.1} parent=1 // pred_region
      %s78 = ssub.s32 2048, 2048
      %79 = vsyncadd [#allocation12], %s78
      %s80 = sshll.u32 [#allocation11], 4
      %s81 = int_to_ptr.vmem [resolvable:$true] %s80
      %86 = dma.hbm_to_vmem [thread:$0]  %s5, 2048, %s81, [#allocation12], 128, 128, 8
    $region25: #{tpu_custom_call.1} parent=1 // pred_fallthru
      _
    // Predicated region
    $region26: #{tpu_custom_call.1} parent=1 // pred_check
      _
    $region27: #{tpu_custom_call.1} parent=1 // pred_check_branch
      %88 = sbr.rel (0) target = $region29
    $region28: #{tpu_custom_call.1} parent=1 // pred_region
      %s90 = ssub.s32 512, 512
      %91 = vsyncadd [#allocation12], %s90
      %s93 = sshll.u32 [#allocation13], 4
      %s94 = int_to_ptr.vmem [resolvable:$true] %s93
      %96 = dma.hbm_to_vmem [thread:$0]  %s6, 512, %s94, [#allocation12]
    $region29: #{tpu_custom_call.1} parent=1 // pred_fallthru
      _
    // Predicated region
    $region30: #{tpu_custom_call.1} parent=1 // pred_check
      _
    $region31: #{tpu_custom_call.1} parent=1 // pred_check_branch
      %98 = sbr.rel (0) target = $region33
    $region32: #{tpu_custom_call.1} parent=1 // pred_region
      %99 = dma.done [#allocation3], 128
    $region33: #{tpu_custom_call.1} parent=1 // pred_fallthru
      _
    // Predicated region
    $region34: #{tpu_custom_call.1} parent=1 // pred_check
      _
    $region35: #{tpu_custom_call.1} parent=1 // pred_check_branch
      %101 = sbr.rel (0) target = $region37
    $region36: #{tpu_custom_call.1} parent=1 // pred_region
      %102 = dma.done [#allocation6], 2048
    $region37: #{tpu_custom_call.1} parent=1 // pred_fallthru
      _
    // Predicated region
    $region38: #{tpu_custom_call.1} parent=1 // pred_check
      _
    $region39: #{tpu_custom_call.1} parent=1 // pred_check_branch
      %104 = sbr.rel (0) target = $region41
    $region40: #{tpu_custom_call.1} parent=1 // pred_region
      %105 = dma.done [#allocation6], 8192
    $region41: #{tpu_custom_call.1} parent=1 // pred_fallthru
      _
    // Predicated region
    $region42: #{tpu_custom_call.1} parent=1 // pred_check
      _
    $region43: #{tpu_custom_call.1} parent=1 // pred_check_branch
      %107 = sbr.rel (0) target = $region45
    $region44: #{tpu_custom_call.1} parent=1 // pred_region
      %108 = dma.done [#allocation9], 2048
    $region45: #{tpu_custom_call.1} parent=1 // pred_fallthru
      _
    // Predicated region
    $region46: #{tpu_custom_call.1} parent=1 // pred_check
      _
    $region47: #{tpu_custom_call.1} parent=1 // pred_check_branch
      %110 = sbr.rel (0) target = $region49
    $region48: #{tpu_custom_call.1} parent=1 // pred_region
      %111 = dma.done [#allocation9], 2048
    $region49: #{tpu_custom_call.1} parent=1 // pred_fallthru
      _
    // Predicated region
    $region50: #{tpu_custom_call.1} parent=1 // pred_check
      _
    $region51: #{tpu_custom_call.1} parent=1 // pred_check_branch
      %113 = sbr.rel (0) target = $region53
    $region52: #{tpu_custom_call.1} parent=1 // pred_region
      %114 = dma.done [#allocation12], 2048
    $region53: #{tpu_custom_call.1} parent=1 // pred_fallthru
      _
    // Predicated region
    $region54: #{tpu_custom_call.1} parent=1 // pred_check
      _
    $region55: #{tpu_custom_call.1} parent=1 // pred_check_branch
      %116 = sbr.rel (0) target = $region57
    $region56: #{tpu_custom_call.1} parent=1 // pred_region
      %117 = dma.done [#allocation12], 512
    $region57: #{tpu_custom_call.1} parent=1 // pred_fallthru
      _
    %v118 = vld [vmem:[#allocation13] ss:$8 sm:$0xf]
    %v119 = vld [vmem:[#allocation13 + $0x1] ss:$0 sm:$0xff]
    %v120 = vld [vmem:[#allocation13 + $0x2] ss:$0 sm:$0xff]
    %v121 = vld [vmem:[#allocation13 + $0x3] ss:$0 sm:$0xff]
    %v122 = vld [vmem:[#allocation13 + $0x4] ss:$0 sm:$0xff]
    %v123 = vld [vmem:[#allocation2] sm:$0xff]
    %v124 = vld [vmem:[#allocation5] sm:$0xff]
    %v125 = vld [vmem:[#allocation5 + $0x8] sm:$0xff]
    %v126 = vld [vmem:[#allocation5 + $0x10] sm:$0xff]
    %v127 = vld [vmem:[#allocation5 + $0x18] sm:$0xff]
    %v128 = vld [vmem:[#allocation5 + $0x20] sm:$0xff]
    %v129 = vld [vmem:[#allocation5 + $0x28] sm:$0xff]
    %v130 = vld [vmem:[#allocation5 + $0x30] sm:$0xff]
    %v131 = vld [vmem:[#allocation5 + $0x38] sm:$0xff]
    %v132 = vld [vmem:[#allocation5 + $0x40] sm:$0xff]
    %v133 = vld [vmem:[#allocation5 + $0x48] sm:$0xff]
    %v134 = vld [vmem:[#allocation5 + $0x50] sm:$0xff]
    %v135 = vld [vmem:[#allocation5 + $0x58] sm:$0xff]
    %v136 = vld [vmem:[#allocation5 + $0x60] sm:$0xff]
    %v137 = vld [vmem:[#allocation5 + $0x68] sm:$0xff]
    %v138 = vld [vmem:[#allocation5 + $0x70] sm:$0xff]
    %v139 = vld [vmem:[#allocation5 + $0x78] sm:$0xff]
    %v141 = vlaneseq
    %v142 = vshrl.u32 %v141, 7
    %v143 = vsub.s32 0, %v142
    %v144 = vrot.slane %v118, %v143
    %v145 = vlaneseq
    %v146 = vshrl.u32 %v145, 7
    %v147 = vsub.s32 1, %v146
    %v148 = vrot.slane %v118, %v147
    %v149 = vlaneseq
    %v150 = vshrl.u32 %v149, 7
    %v151 = vsub.s32 2, %v150
    %v152 = vrot.slane %v118, %v151
    %v153 = vlaneseq
    %v154 = vshrl.u32 %v153, 7
    %v155 = vsub.s32 3, %v154
    %v156 = vrot.slane %v118, %v155
    %vm161 = vcmask 261120
    %v163 = vsel %vm161, %v123, 0
    %165 = vmatprep.subr.mxu0 0.0
    %166 = vmatpush1.msra.mxu0 0.0
    %167 = vmatprep.subr.mxu0 0.0
    %168 = vmatpush1.msra.mxu0 0.0
    %169 = vmatprep.subr.mxu0 0.0
    %170 = vmatpush1.msra.mxu0 0.0
    %171 = vmatprep.subr.mxu0 0.0
    %172 = vmatpush1.msra.mxu0 0.0
    %173 = vmatprep.subr.mxu0 0.0
    %174 = vmatpush1.msra.mxu0 0.0
    %175 = vmatprep.subr.mxu0 0.0
    %176 = vmatpush1.msra.mxu0 0.0
    %177 = vmatprep.subr.mxu0 0.0
    %178 = vmatpush1.msra.mxu0 0.0
    %179 = vmatprep.subr.mxu0 0.0
    %180 = vmatpush1.msra.mxu0 0.0
    %181 = vmatprep.subr.mxu0 0.0
    %182 = vmatpush1.msra.mxu0 0.0
    %183 = vmatprep.subr.mxu0 0.0
    %184 = vmatpush1.msra.mxu0 0.0
    %185 = vmatprep.subr.mxu0 0.0
    %186 = vmatpush1.msra.mxu0 0.0
    %187 = vmatprep.subr.mxu0 0.0
    %188 = vmatpush1.msra.mxu0 0.0
    %189 = vmatprep.subr.mxu0 %v137
    %190 = vmatpush1.msra.mxu0 %v136
    %191 = vmatprep.subr.mxu0 %v133
    %192 = vmatpush1.msra.mxu0 %v132
    %193 = vmatprep.subr.mxu0 %v129
    %194 = vmatpush1.msra.mxu0 %v128
    %195 = vmatprep.subr.mxu0 %v125
    %196 = vmatpush1.msra.mxu0 %v124
    %197 = vmatprep.subr.mxu0 0.0
    %198 = vmatpush2.msra.mxu0 0.0
    %199 = vmatprep.subr.mxu0 0.0
    %200 = vmatpush2.msra.mxu0 0.0
    %201 = vmatprep.subr.mxu0 0.0
    %202 = vmatpush2.msra.mxu0 0.0
    %203 = vmatprep.subr.mxu0 0.0
    %204 = vmatpush2.msra.mxu0 0.0
    %205 = vmatprep.subr.mxu0 0.0
    %206 = vmatpush2.msra.mxu0 0.0
    %207 = vmatprep.subr.mxu0 0.0
    %208 = vmatpush2.msra.mxu0 0.0
    %209 = vmatprep.subr.mxu0 0.0
    %210 = vmatpush2.msra.mxu0 0.0
    %211 = vmatprep.subr.mxu0 0.0
    %212 = vmatpush2.msra.mxu0 0.0
    %213 = vmatprep.subr.mxu0 0.0
    %214 = vmatpush2.msra.mxu0 0.0
    %215 = vmatprep.subr.mxu0 0.0
    %216 = vmatpush2.msra.mxu0 0.0
    %217 = vmatprep.subr.mxu0 0.0
    %218 = vmatpush2.msra.mxu0 0.0
    %219 = vmatprep.subr.mxu0 0.0
    %220 = vmatpush2.msra.mxu0 0.0
    %221 = vmatprep.subr.mxu0 0.0
    %222 = vmatpush2.msra.mxu0 0.0
    %223 = vmatprep.subr.mxu0 0.0
    %224 = vmatpush2.msra.mxu0 0.0
    %225 = vmatprep.subr.mxu0 0.0
    %226 = vmatpush2.msra.mxu0 0.0
    %227 = vmatprep.subr.mxu0 0.0
    %228 = vmatpush2.msra.mxu0 0.0
    %229 = vmatprep.mubr.f32.mxu0 0.0
    %230 = vmatmul.mubr.f32.gmra.mxu0 %v163
    %v231 = vpop.f32.mrf.mxu0
    %v232 = vadd.f32 %v144, %v231
    %v233 = vpop.f32.mrf.mxu0
    %v234 = vadd.f32 %v148, %v233
    %235 = vdwg.mxu0
    %236 = vmatprep.subr.mxu0 0.0
    %237 = vmatpush1.msra.mxu0 0.0
    %238 = vmatprep.subr.mxu0 0.0
    %239 = vmatpush1.msra.mxu0 0.0
    %240 = vmatprep.subr.mxu0 0.0
    %241 = vmatpush1.msra.mxu0 0.0
    %242 = vmatprep.subr.mxu0 0.0
    %243 = vmatpush1.msra.mxu0 0.0
    %244 = vmatprep.subr.mxu0 0.0
    %245 = vmatpush1.msra.mxu0 0.0
    %246 = vmatprep.subr.mxu0 0.0
    %247 = vmatpush1.msra.mxu0 0.0
    %248 = vmatprep.subr.mxu0 0.0
    %249 = vmatpush1.msra.mxu0 0.0
    %250 = vmatprep.subr.mxu0 0.0
    %251 = vmatpush1.msra.mxu0 0.0
    %252 = vmatprep.subr.mxu0 0.0
    %253 = vmatpush1.msra.mxu0 0.0
    %254 = vmatprep.subr.mxu0 0.0
    %255 = vmatpush1.msra.mxu0 0.0
    %256 = vmatprep.subr.mxu0 0.0
    %257 = vmatpush1.msra.mxu0 0.0
    %258 = vmatprep.subr.mxu0 0.0
    %259 = vmatpush1.msra.mxu0 0.0
    %260 = vmatprep.subr.mxu0 %v139
    %261 = vmatpush1.msra.mxu0 %v138
    %262 = vmatprep.subr.mxu0 %v135
    %263 = vmatpush1.msra.mxu0 %v134
    %264 = vmatprep.subr.mxu0 %v131
    %265 = vmatpush1.msra.mxu0 %v130
    %266 = vmatprep.subr.mxu0 %v127
    %267 = vmatpush1.msra.mxu0 %v126
    %268 = vmatprep.subr.mxu0 0.0
    %269 = vmatpush2.msra.mxu0 0.0
    %270 = vmatprep.subr.mxu0 0.0
    %271 = vmatpush2.msra.mxu0 0.0
    %272 = vmatprep.subr.mxu0 0.0
    %273 = vmatpush2.msra.mxu0 0.0
    %274 = vmatprep.subr.mxu0 0.0
    %275 = vmatpush2.msra.mxu0 0.0
    %276 = vmatprep.subr.mxu0 0.0
    %277 = vmatpush2.msra.mxu0 0.0
    %278 = vmatprep.subr.mxu0 0.0
    %279 = vmatpush2.msra.mxu0 0.0
    %280 = vmatprep.subr.mxu0 0.0
    %281 = vmatpush2.msra.mxu0 0.0
    %282 = vmatprep.subr.mxu0 0.0
    %283 = vmatpush2.msra.mxu0 0.0
    %284 = vmatprep.subr.mxu0 0.0
    %285 = vmatpush2.msra.mxu0 0.0
    %286 = vmatprep.subr.mxu0 0.0
    %287 = vmatpush2.msra.mxu0 0.0
    %288 = vmatprep.subr.mxu0 0.0
    %289 = vmatpush2.msra.mxu0 0.0
    %290 = vmatprep.subr.mxu0 0.0
    %291 = vmatpush2.msra.mxu0 0.0
    %292 = vmatprep.subr.mxu0 0.0
    %293 = vmatpush2.msra.mxu0 0.0
    %294 = vmatprep.subr.mxu0 0.0
    %295 = vmatpush2.msra.mxu0 0.0
    %296 = vmatprep.subr.mxu0 0.0
    %297 = vmatpush2.msra.mxu0 0.0
    %298 = vmatprep.subr.mxu0 0.0
    %299 = vmatpush2.msra.mxu0 0.0
    %300 = vmatprep.mubr.f32.mxu0 0.0
    %301 = vmatmul.mubr.f32.gmra.mxu0 %v163
    %v302 = vpop.f32.mrf.mxu0
    %v303 = vadd.f32 %v152, %v302
    %v304 = vpop.f32.mrf.mxu0
    %v305 = vadd.f32 %v156, %v304
    %306 = vdwg.mxu0
    %v307 = vmax.f32 %v232, 0.0
    %v308 = vmax.f32 %v234, 0.0
    %v309 = vmax.f32 %v303, 0.0
    %v310 = vmax.f32 %v305, 0.0
    %v311 = vld [vmem:[#allocation7] sm:$0xff]
    %v312 = vld [vmem:[#allocation7 + $0x8] sm:$0xff]
    %v313 = vld [vmem:[#allocation7 + $0x10] sm:$0xff]
    %v314 = vld [vmem:[#allocation7 + $0x18] sm:$0xff]
    %v315 = vld [vmem:[#allocation7 + $0x20] sm:$0xff]
    %v316 = vld [vmem:[#allocation7 + $0x28] sm:$0xff]
    %v317 = vld [vmem:[#allocation7 + $0x30] sm:$0xff]
    %v318 = vld [vmem:[#allocation7 + $0x38] sm:$0xff]
    %v319 = vld [vmem:[#allocation7 + $0x40] sm:$0xff]
    %v320 = vld [vmem:[#allocation7 + $0x48] sm:$0xff]
    %v321 = vld [vmem:[#allocation7 + $0x50] sm:$0xff]
    %v322 = vld [vmem:[#allocation7 + $0x58] sm:$0xff]
    %v323 = vld [vmem:[#allocation7 + $0x60] sm:$0xff]
    %v324 = vld [vmem:[#allocation7 + $0x68] sm:$0xff]
    %v325 = vld [vmem:[#allocation7 + $0x70] sm:$0xff]
    %v326 = vld [vmem:[#allocation7 + $0x78] sm:$0xff]
    %v327 = vld [vmem:[#allocation7 + $0x80] sm:$0xff]
    %v328 = vld [vmem:[#allocation7 + $0x88] sm:$0xff]
    %v329 = vld [vmem:[#allocation7 + $0x90] sm:$0xff]
    %v330 = vld [vmem:[#allocation7 + $0x98] sm:$0xff]
    %v331 = vld [vmem:[#allocation7 + $0xa0] sm:$0xff]
    %v332 = vld [vmem:[#allocation7 + $0xa8] sm:$0xff]
    %v333 = vld [vmem:[#allocation7 + $0xb0] sm:$0xff]
    %v334 = vld [vmem:[#allocation7 + $0xb8] sm:$0xff]
    %v335 = vld [vmem:[#allocation7 + $0xc0] sm:$0xff]
    %v336 = vld [vmem:[#allocation7 + $0xc8] sm:$0xff]
    %v337 = vld [vmem:[#allocation7 + $0xd0] sm:$0xff]
    %v338 = vld [vmem:[#allocation7 + $0xd8] sm:$0xff]
    %v339 = vld [vmem:[#allocation7 + $0xe0] sm:$0xff]
    %v340 = vld [vmem:[#allocation7 + $0xe8] sm:$0xff]
    %v341 = vld [vmem:[#allocation7 + $0xf0] sm:$0xff]
    %v342 = vld [vmem:[#allocation7 + $0xf8] sm:$0xff]
    %v343 = vld [vmem:[#allocation7 + $0x100] sm:$0xff]
    %v344 = vld [vmem:[#allocation7 + $0x108] sm:$0xff]
    %v345 = vld [vmem:[#allocation7 + $0x110] sm:$0xff]
    %v346 = vld [vmem:[#allocation7 + $0x118] sm:$0xff]
    %v347 = vld [vmem:[#allocation7 + $0x120] sm:$0xff]
    %v348 = vld [vmem:[#allocation7 + $0x128] sm:$0xff]
    %v349 = vld [vmem:[#allocation7 + $0x130] sm:$0xff]
    %v350 = vld [vmem:[#allocation7 + $0x138] sm:$0xff]
    %v351 = vld [vmem:[#allocation7 + $0x140] sm:$0xff]
    %v352 = vld [vmem:[#allocation7 + $0x148] sm:$0xff]
    %v353 = vld [vmem:[#allocation7 + $0x150] sm:$0xff]
    %v354 = vld [vmem:[#allocation7 + $0x158] sm:$0xff]
    %v355 = vld [vmem:[#allocation7 + $0x160] sm:$0xff]
    %v356 = vld [vmem:[#allocation7 + $0x168] sm:$0xff]
    %v357 = vld [vmem:[#allocation7 + $0x170] sm:$0xff]
    %v358 = vld [vmem:[#allocation7 + $0x178] sm:$0xff]
    %v359 = vld [vmem:[#allocation7 + $0x180] sm:$0xff]
    %v360 = vld [vmem:[#allocation7 + $0x188] sm:$0xff]
    %v361 = vld [vmem:[#allocation7 + $0x190] sm:$0xff]
    %v362 = vld [vmem:[#allocation7 + $0x198] sm:$0xff]
    %v363 = vld [vmem:[#allocation7 + $0x1a0] sm:$0xff]
    %v364 = vld [vmem:[#allocation7 + $0x1a8] sm:$0xff]
    %v365 = vld [vmem:[#allocation7 + $0x1b0] sm:$0xff]
    %v366 = vld [vmem:[#allocation7 + $0x1b8] sm:$0xff]
    %v367 = vld [vmem:[#allocation7 + $0x1c0] sm:$0xff]
    %v368 = vld [vmem:[#allocation7 + $0x1c8] sm:$0xff]
    %v369 = vld [vmem:[#allocation7 + $0x1d0] sm:$0xff]
    %v370 = vld [vmem:[#allocation7 + $0x1d8] sm:$0xff]
    %v371 = vld [vmem:[#allocation7 + $0x1e0] sm:$0xff]
    %v372 = vld [vmem:[#allocation7 + $0x1e8] sm:$0xff]
    %v373 = vld [vmem:[#allocation7 + $0x1f0] sm:$0xff]
    %v374 = vld [vmem:[#allocation7 + $0x1f8] sm:$0xff]
    %375 = vmatprep.subr.mxu0 0.0
    %376 = vmatpush1.msra.mxu0 %v326
    %377 = vmatprep.subr.mxu0 0.0
    %378 = vmatpush1.msra.mxu0 %v325
    %379 = vmatprep.subr.mxu0 0.0
    %380 = vmatpush1.msra.mxu0 %v324
    %381 = vmatprep.subr.mxu0 0.0
    %382 = vmatpush1.msra.mxu0 %v323
    %383 = vmatprep.subr.mxu0 0.0
    %384 = vmatpush1.msra.mxu0 %v322
    %385 = vmatprep.subr.mxu0 0.0
    %386 = vmatpush1.msra.mxu0 %v321
    %387 = vmatprep.subr.mxu0 0.0
    %388 = vmatpush1.msra.mxu0 %v320
    %389 = vmatprep.subr.mxu0 0.0
    %390 = vmatpush1.msra.mxu0 %v319
    %391 = vmatprep.subr.mxu0 0.0
    %392 = vmatpush1.msra.mxu0 %v318
    %393 = vmatprep.subr.mxu0 0.0
    %394 = vmatpush1.msra.mxu0 %v317
    %395 = vmatprep.subr.mxu0 0.0
    %396 = vmatpush1.msra.mxu0 %v316
    %397 = vmatprep.subr.mxu0 0.0
    %398 = vmatpush1.msra.mxu0 %v315
    %399 = vmatprep.subr.mxu0 0.0
    %400 = vmatpush1.msra.mxu0 %v314
    %401 = vmatprep.subr.mxu0 0.0
    %402 = vmatpush1.msra.mxu0 %v313
    %403 = vmatprep.subr.mxu0 0.0
    %404 = vmatpush1.msra.mxu0 %v312
    %405 = vmatprep.subr.mxu0 0.0
    %406 = vmatpush1.msra.mxu0 %v311
    %407 = vmatprep.subr.mxu0 0.0
    %408 = vmatpush2.msra.mxu0 %v342
    %409 = vmatprep.subr.mxu0 0.0
    %410 = vmatpush2.msra.mxu0 %v341
    %411 = vmatprep.subr.mxu0 0.0
    %412 = vmatpush2.msra.mxu0 %v340
    %413 = vmatprep.subr.mxu0 0.0
    %414 = vmatpush2.msra.mxu0 %v339
    %415 = vmatprep.subr.mxu0 0.0
    %416 = vmatpush2.msra.mxu0 %v338
    %417 = vmatprep.subr.mxu0 0.0
    %418 = vmatpush2.msra.mxu0 %v337
    %419 = vmatprep.subr.mxu0 0.0
    %420 = vmatpush2.msra.mxu0 %v336
    %421 = vmatprep.subr.mxu0 0.0
    %422 = vmatpush2.msra.mxu0 %v335
    %423 = vmatprep.subr.mxu0 0.0
    %424 = vmatpush2.msra.mxu0 %v334
    %425 = vmatprep.subr.mxu0 0.0
    %426 = vmatpush2.msra.mxu0 %v333
    %427 = vmatprep.subr.mxu0 0.0
    %428 = vmatpush2.msra.mxu0 %v332
    %429 = vmatprep.subr.mxu0 0.0
    %430 = vmatpush2.msra.mxu0 %v331
    %431 = vmatprep.subr.mxu0 0.0
    %432 = vmatpush2.msra.mxu0 %v330
    %433 = vmatprep.subr.mxu0 0.0
    %434 = vmatpush2.msra.mxu0 %v329
    %435 = vmatprep.subr.mxu0 0.0
    %436 = vmatpush2.msra.mxu0 %v328
    %437 = vmatprep.subr.mxu0 0.0
    %438 = vmatpush2.msra.mxu0 %v327
    %439 = vmatprep.mubr.f32.mxu0 %v308
    %440 = vmatmul.mubr.f32.gmra.mxu0 %v307
    %v441 = vpop.f32.mrf.mxu0
    %v442 = vadd.f32 %v119, %v441
    %v443 = vpop.f32.mrf.mxu0
    %444 = vdwg.mxu0
    %445 = vmatprep.subr.mxu0 0.0
    %446 = vmatpush1.msra.mxu0 %v358
    %447 = vmatprep.subr.mxu0 0.0
    %448 = vmatpush1.msra.mxu0 %v357
    %449 = vmatprep.subr.mxu0 0.0
    %450 = vmatpush1.msra.mxu0 %v356
    %451 = vmatprep.subr.mxu0 0.0
    %452 = vmatpush1.msra.mxu0 %v355
    %453 = vmatprep.subr.mxu0 0.0
    %454 = vmatpush1.msra.mxu0 %v354
    %455 = vmatprep.subr.mxu0 0.0
    %456 = vmatpush1.msra.mxu0 %v353
    %457 = vmatprep.subr.mxu0 0.0
    %458 = vmatpush1.msra.mxu0 %v352
    %459 = vmatprep.subr.mxu0 0.0
    %460 = vmatpush1.msra.mxu0 %v351
    %461 = vmatprep.subr.mxu0 0.0
    %462 = vmatpush1.msra.mxu0 %v350
    %463 = vmatprep.subr.mxu0 0.0
    %464 = vmatpush1.msra.mxu0 %v349
    %465 = vmatprep.subr.mxu0 0.0
    %466 = vmatpush1.msra.mxu0 %v348
    %467 = vmatprep.subr.mxu0 0.0
    %468 = vmatpush1.msra.mxu0 %v347
    %469 = vmatprep.subr.mxu0 0.0
    %470 = vmatpush1.msra.mxu0 %v346
    %471 = vmatprep.subr.mxu0 0.0
    %472 = vmatpush1.msra.mxu0 %v345
    %473 = vmatprep.subr.mxu0 0.0
    %474 = vmatpush1.msra.mxu0 %v344
    %475 = vmatprep.subr.mxu0 0.0
    %476 = vmatpush1.msra.mxu0 %v343
    %477 = vmatprep.subr.mxu0 0.0
    %478 = vmatpush2.msra.mxu0 %v374
    %479 = vmatprep.subr.mxu0 0.0
    %480 = vmatpush2.msra.mxu0 %v373
    %481 = vmatprep.subr.mxu0 0.0
    %482 = vmatpush2.msra.mxu0 %v372
    %483 = vmatprep.subr.mxu0 0.0
    %484 = vmatpush2.msra.mxu0 %v371
    %485 = vmatprep.subr.mxu0 0.0
    %486 = vmatpush2.msra.mxu0 %v370
    %487 = vmatprep.subr.mxu0 0.0
    %488 = vmatpush2.msra.mxu0 %v369
    %489 = vmatprep.subr.mxu0 0.0
    %490 = vmatpush2.msra.mxu0 %v368
    %491 = vmatprep.subr.mxu0 0.0
    %492 = vmatpush2.msra.mxu0 %v367
    %493 = vmatprep.subr.mxu0 0.0
    %494 = vmatpush2.msra.mxu0 %v366
    %495 = vmatprep.subr.mxu0 0.0
    %496 = vmatpush2.msra.mxu0 %v365
    %497 = vmatprep.subr.mxu0 0.0
    %498 = vmatpush2.msra.mxu0 %v364
    %499 = vmatprep.subr.mxu0 0.0
    %500 = vmatpush2.msra.mxu0 %v363
    %501 = vmatprep.subr.mxu0 0.0
    %502 = vmatpush2.msra.mxu0 %v362
    %503 = vmatprep.subr.mxu0 0.0
    %504 = vmatpush2.msra.mxu0 %v361
    %505 = vmatprep.subr.mxu0 0.0
    %506 = vmatpush2.msra.mxu0 %v360
    %507 = vmatprep.subr.mxu0 0.0
    %508 = vmatpush2.msra.mxu0 %v359
    %509 = vmatprep.mubr.f32.mxu0 %v310
    %510 = vmatmul.mubr.f32.gmra.mxu0 %v309
    %v511 = vpop.f32.mrf.mxu0
    %v512 = vadd.f32 %v442, %v511
    %v513 = vpop.f32.mrf.mxu0
    %514 = vdwg.mxu0
    %v515 = vmax.f32 %v512, 0.0
    %v516 = vld [vmem:[#allocation8] sm:$0xff]
    %v517 = vld [vmem:[#allocation8 + $0x8] sm:$0xff]
    %v518 = vld [vmem:[#allocation8 + $0x10] sm:$0xff]
    %v519 = vld [vmem:[#allocation8 + $0x18] sm:$0xff]
    %v520 = vld [vmem:[#allocation8 + $0x20] sm:$0xff]
    %v521 = vld [vmem:[#allocation8 + $0x28] sm:$0xff]
    %v522 = vld [vmem:[#allocation8 + $0x30] sm:$0xff]
    %v523 = vld [vmem:[#allocation8 + $0x38] sm:$0xff]
    %v524 = vld [vmem:[#allocation8 + $0x40] sm:$0xff]
    %v525 = vld [vmem:[#allocation8 + $0x48] sm:$0xff]
    %v526 = vld [vmem:[#allocation8 + $0x50] sm:$0xff]
    %v527 = vld [vmem:[#allocation8 + $0x58] sm:$0xff]
    %v528 = vld [vmem:[#allocation8 + $0x60] sm:$0xff]
    %v529 = vld [vmem:[#allocation8 + $0x68] sm:$0xff]
    %v530 = vld [vmem:[#allocation8 + $0x70] sm:$0xff]
    %v531 = vld [vmem:[#allocation8 + $0x78] sm:$0xff]
    %532 = vmatprep.subr.mxu0 0.0
    %533 = vmatpush1.msra.mxu0 %v531
    %534 = vmatprep.subr.mxu0 0.0
    %535 = vmatpush1.msra.mxu0 %v530
    %536 = vmatprep.subr.mxu0 0.0
    %537 = vmatpush1.msra.mxu0 %v529
    %538 = vmatprep.subr.mxu0 0.0
    %539 = vmatpush1.msra.mxu0 %v528
    %540 = vmatprep.subr.mxu0 0.0
    %541 = vmatpush1.msra.mxu0 %v527
    %542 = vmatprep.subr.mxu0 0.0
    %543 = vmatpush1.msra.mxu0 %v526
    %544 = vmatprep.subr.mxu0 0.0
    %545 = vmatpush1.msra.mxu0 %v525
    %546 = vmatprep.subr.mxu0 0.0
    %547 = vmatpush1.msra.mxu0 %v524
    %548 = vmatprep.subr.mxu0 0.0
    %549 = vmatpush1.msra.mxu0 %v523
    %550 = vmatprep.subr.mxu0 0.0
    %551 = vmatpush1.msra.mxu0 %v522
    %552 = vmatprep.subr.mxu0 0.0
    %553 = vmatpush1.msra.mxu0 %v521
    %554 = vmatprep.subr.mxu0 0.0
    %555 = vmatpush1.msra.mxu0 %v520
    %556 = vmatprep.subr.mxu0 0.0
    %557 = vmatpush1.msra.mxu0 %v519
    %558 = vmatprep.subr.mxu0 0.0
    %559 = vmatpush1.msra.mxu0 %v518
    %560 = vmatprep.subr.mxu0 0.0
    %561 = vmatpush1.msra.mxu0 %v517
    %562 = vmatprep.subr.mxu0 0.0
    %563 = vmatpush1.msra.mxu0 %v516
    %564 = vmatprep.subr.mxu0 0.0
    %565 = vmatpush2.msra.mxu0 0.0
    %566 = vmatprep.subr.mxu0 0.0
    %567 = vmatpush2.msra.mxu0 0.0
    %568 = vmatprep.subr.mxu0 0.0
    %569 = vmatpush2.msra.mxu0 0.0
    %570 = vmatprep.subr.mxu0 0.0
    %571 = vmatpush2.msra.mxu0 0.0
    %572 = vmatprep.subr.mxu0 0.0
    %573 = vmatpush2.msra.mxu0 0.0
    %574 = vmatprep.subr.mxu0 0.0
    %575 = vmatpush2.msra.mxu0 0.0
    %576 = vmatprep.subr.mxu0 0.0
    %577 = vmatpush2.msra.mxu0 0.0
    %578 = vmatprep.subr.mxu0 0.0
    %579 = vmatpush2.msra.mxu0 0.0
    %580 = vmatprep.subr.mxu0 0.0
    %581 = vmatpush2.msra.mxu0 0.0
    %582 = vmatprep.subr.mxu0 0.0
    %583 = vmatpush2.msra.mxu0 0.0
    %584 = vmatprep.subr.mxu0 0.0
    %585 = vmatpush2.msra.mxu0 0.0
    %586 = vmatprep.subr.mxu0 0.0
    %587 = vmatpush2.msra.mxu0 0.0
    %588 = vmatprep.subr.mxu0 0.0
    %589 = vmatpush2.msra.mxu0 0.0
    %590 = vmatprep.subr.mxu0 0.0
    %591 = vmatpush2.msra.mxu0 0.0
    %592 = vmatprep.subr.mxu0 0.0
    %593 = vmatpush2.msra.mxu0 0.0
    %594 = vmatprep.subr.mxu0 0.0
    %595 = vmatpush2.msra.mxu0 0.0
    %596 = vmatprep.mubr.f32.mxu0 0.0
    %597 = vmatmul.mubr.f32.gmra.mxu0 %v515
    %v598 = vpop.f32.mrf.mxu0
    %v599 = vadd.f32 %v120, %v598
    %v600 = vpop.f32.mrf.mxu0
    %601 = vdwg.mxu0
    %v602 = vmax.f32 %v599, 0.0
    %v603 = vld [vmem:[#allocation10] sm:$0xff]
    %v604 = vld [vmem:[#allocation10 + $0x8] sm:$0xff]
    %v605 = vld [vmem:[#allocation10 + $0x10] sm:$0xff]
    %v606 = vld [vmem:[#allocation10 + $0x18] sm:$0xff]
    %v607 = vld [vmem:[#allocation10 + $0x20] sm:$0xff]
    %v608 = vld [vmem:[#allocation10 + $0x28] sm:$0xff]
    %v609 = vld [vmem:[#allocation10 + $0x30] sm:$0xff]
    %v610 = vld [vmem:[#allocation10 + $0x38] sm:$0xff]
    %v611 = vld [vmem:[#allocation10 + $0x40] sm:$0xff]
    %v612 = vld [vmem:[#allocation10 + $0x48] sm:$0xff]
    %v613 = vld [vmem:[#allocation10 + $0x50] sm:$0xff]
    %v614 = vld [vmem:[#allocation10 + $0x58] sm:$0xff]
    %v615 = vld [vmem:[#allocation10 + $0x60] sm:$0xff]
    %v616 = vld [vmem:[#allocation10 + $0x68] sm:$0xff]
    %v617 = vld [vmem:[#allocation10 + $0x70] sm:$0xff]
    %v618 = vld [vmem:[#allocation10 + $0x78] sm:$0xff]
    %619 = vmatprep.subr.mxu0 0.0
    %620 = vmatpush1.msra.mxu0 %v618
    %621 = vmatprep.subr.mxu0 0.0
    %622 = vmatpush1.msra.mxu0 %v617
    %623 = vmatprep.subr.mxu0 0.0
    %624 = vmatpush1.msra.mxu0 %v616
    %625 = vmatprep.subr.mxu0 0.0
    %626 = vmatpush1.msra.mxu0 %v615
    %627 = vmatprep.subr.mxu0 0.0
    %628 = vmatpush1.msra.mxu0 %v614
    %629 = vmatprep.subr.mxu0 0.0
    %630 = vmatpush1.msra.mxu0 %v613
    %631 = vmatprep.subr.mxu0 0.0
    %632 = vmatpush1.msra.mxu0 %v612
    %633 = vmatprep.subr.mxu0 0.0
    %634 = vmatpush1.msra.mxu0 %v611
    %635 = vmatprep.subr.mxu0 0.0
    %636 = vmatpush1.msra.mxu0 %v610
    %637 = vmatprep.subr.mxu0 0.0
    %638 = vmatpush1.msra.mxu0 %v609
    %639 = vmatprep.subr.mxu0 0.0
    %640 = vmatpush1.msra.mxu0 %v608
    %641 = vmatprep.subr.mxu0 0.0
    %642 = vmatpush1.msra.mxu0 %v607
    %643 = vmatprep.subr.mxu0 0.0
    %644 = vmatpush1.msra.mxu0 %v606
    %645 = vmatprep.subr.mxu0 0.0
    %646 = vmatpush1.msra.mxu0 %v605
    %647 = vmatprep.subr.mxu0 0.0
    %648 = vmatpush1.msra.mxu0 %v604
    %649 = vmatprep.subr.mxu0 0.0
    %650 = vmatpush1.msra.mxu0 %v603
    %651 = vmatprep.subr.mxu0 0.0
    %652 = vmatpush2.msra.mxu0 0.0
    %653 = vmatprep.subr.mxu0 0.0
    %654 = vmatpush2.msra.mxu0 0.0
    %655 = vmatprep.subr.mxu0 0.0
    %656 = vmatpush2.msra.mxu0 0.0
    %657 = vmatprep.subr.mxu0 0.0
    %658 = vmatpush2.msra.mxu0 0.0
    %659 = vmatprep.subr.mxu0 0.0
    %660 = vmatpush2.msra.mxu0 0.0
    %661 = vmatprep.subr.mxu0 0.0
    %662 = vmatpush2.msra.mxu0 0.0
    %663 = vmatprep.subr.mxu0 0.0
    %664 = vmatpush2.msra.mxu0 0.0
    %665 = vmatprep.subr.mxu0 0.0
    %666 = vmatpush2.msra.mxu0 0.0
    %667 = vmatprep.subr.mxu0 0.0
    %668 = vmatpush2.msra.mxu0 0.0
    %669 = vmatprep.subr.mxu0 0.0
    %670 = vmatpush2.msra.mxu0 0.0
    %671 = vmatprep.subr.mxu0 0.0
    %672 = vmatpush2.msra.mxu0 0.0
    %673 = vmatprep.subr.mxu0 0.0
    %674 = vmatpush2.msra.mxu0 0.0
    %675 = vmatprep.subr.mxu0 0.0
    %676 = vmatpush2.msra.mxu0 0.0
    %677 = vmatprep.subr.mxu0 0.0
    %678 = vmatpush2.msra.mxu0 0.0
    %679 = vmatprep.subr.mxu0 0.0
    %680 = vmatpush2.msra.mxu0 0.0
    %681 = vmatprep.subr.mxu0 0.0
    %682 = vmatpush2.msra.mxu0 0.0
    %683 = vmatprep.mubr.f32.mxu0 0.0
    %684 = vmatmul.mubr.f32.gmra.mxu0 %v602
    %v685 = vpop.f32.mrf.mxu0
    %v686 = vadd.f32 %v121, %v685
    %v687 = vpop.f32.mrf.mxu0
    %688 = vdwg.mxu0
    %v689 = vmax.f32 %v686, 0.0
    %v690 = vld [vmem:[#allocation11] sm:$0xff]
    %v691 = vld [vmem:[#allocation11 + $0x8] sm:$0xff]
    %v692 = vld [vmem:[#allocation11 + $0x10] sm:$0xff]
    %v693 = vld [vmem:[#allocation11 + $0x18] sm:$0xff]
    %v694 = vld [vmem:[#allocation11 + $0x20] sm:$0xff]
    %v695 = vld [vmem:[#allocation11 + $0x28] sm:$0xff]
    %v696 = vld [vmem:[#allocation11 + $0x30] sm:$0xff]
    %v697 = vld [vmem:[#allocation11 + $0x38] sm:$0xff]
    %v698 = vld [vmem:[#allocation11 + $0x40] sm:$0xff]
    %v699 = vld [vmem:[#allocation11 + $0x48] sm:$0xff]
    %v700 = vld [vmem:[#allocation11 + $0x50] sm:$0xff]
    %v701 = vld [vmem:[#allocation11 + $0x58] sm:$0xff]
    %v702 = vld [vmem:[#allocation11 + $0x60] sm:$0xff]
    %v703 = vld [vmem:[#allocation11 + $0x68] sm:$0xff]
    %v704 = vld [vmem:[#allocation11 + $0x70] sm:$0xff]
    %v705 = vld [vmem:[#allocation11 + $0x78] sm:$0xff]
    %706 = vmatprep.subr.mxu0 0.0
    %707 = vmatpush1.msra.mxu0 %v705
    %708 = vmatprep.subr.mxu0 0.0
    %709 = vmatpush1.msra.mxu0 %v704
    %710 = vmatprep.subr.mxu0 0.0
    %711 = vmatpush1.msra.mxu0 %v703
    %712 = vmatprep.subr.mxu0 0.0
    %713 = vmatpush1.msra.mxu0 %v702
    %714 = vmatprep.subr.mxu0 0.0
    %715 = vmatpush1.msra.mxu0 %v701
    %716 = vmatprep.subr.mxu0 0.0
    %717 = vmatpush1.msra.mxu0 %v700
    %718 = vmatprep.subr.mxu0 0.0
    %719 = vmatpush1.msra.mxu0 %v699
    %720 = vmatprep.subr.mxu0 0.0
    %721 = vmatpush1.msra.mxu0 %v698
    %722 = vmatprep.subr.mxu0 0.0
    %723 = vmatpush1.msra.mxu0 %v697
    %724 = vmatprep.subr.mxu0 0.0
    %725 = vmatpush1.msra.mxu0 %v696
    %726 = vmatprep.subr.mxu0 0.0
    %727 = vmatpush1.msra.mxu0 %v695
    %728 = vmatprep.subr.mxu0 0.0
    %729 = vmatpush1.msra.mxu0 %v694
    %730 = vmatprep.subr.mxu0 0.0
    %731 = vmatpush1.msra.mxu0 %v693
    %732 = vmatprep.subr.mxu0 0.0
    %733 = vmatpush1.msra.mxu0 %v692
    %734 = vmatprep.subr.mxu0 0.0
    %735 = vmatpush1.msra.mxu0 %v691
    %736 = vmatprep.subr.mxu0 0.0
    %737 = vmatpush1.msra.mxu0 %v690
    %738 = vmatprep.subr.mxu0 0.0
    %739 = vmatpush2.msra.mxu0 0.0
    %740 = vmatprep.subr.mxu0 0.0
    %741 = vmatpush2.msra.mxu0 0.0
    %742 = vmatprep.subr.mxu0 0.0
    %743 = vmatpush2.msra.mxu0 0.0
    %744 = vmatprep.subr.mxu0 0.0
    %745 = vmatpush2.msra.mxu0 0.0
    %746 = vmatprep.subr.mxu0 0.0
    %747 = vmatpush2.msra.mxu0 0.0
    %748 = vmatprep.subr.mxu0 0.0
    %749 = vmatpush2.msra.mxu0 0.0
    %750 = vmatprep.subr.mxu0 0.0
    %751 = vmatpush2.msra.mxu0 0.0
    %752 = vmatprep.subr.mxu0 0.0
    %753 = vmatpush2.msra.mxu0 0.0
    %754 = vmatprep.subr.mxu0 0.0
    %755 = vmatpush2.msra.mxu0 0.0
    %756 = vmatprep.subr.mxu0 0.0
    %757 = vmatpush2.msra.mxu0 0.0
    %758 = vmatprep.subr.mxu0 0.0
    %759 = vmatpush2.msra.mxu0 0.0
    %760 = vmatprep.subr.mxu0 0.0
    %761 = vmatpush2.msra.mxu0 0.0
    %762 = vmatprep.subr.mxu0 0.0
    %763 = vmatpush2.msra.mxu0 0.0
    %764 = vmatprep.subr.mxu0 0.0
    %765 = vmatpush2.msra.mxu0 0.0
    %766 = vmatprep.subr.mxu0 0.0
    %767 = vmatpush2.msra.mxu0 0.0
    %768 = vmatprep.subr.mxu0 0.0
    %769 = vmatpush2.msra.mxu0 0.0
    %770 = vmatprep.mubr.f32.mxu0 0.0
    %771 = vmatmul.mubr.f32.gmra.mxu0 %v689
    %v772 = vpop.f32.mrf.mxu0
    %v773 = vadd.f32 %v122, %v772
    %v774 = vpop.f32.mrf.mxu0
    %775 = vdwg.mxu0
    %v776 = vmax.f32 %v773, 0.0
    %777 = vst [vmem:[#allocation14] sm:$0xff] %v776
    // Predicated region
    $region58: #{tpu_custom_call.1} parent=1 // pred_check
      _
    $region59: #{tpu_custom_call.1} parent=1 // pred_check_branch
      %779 = sbr.rel (0) target = $region61
    $region60: #{tpu_custom_call.1} parent=1 // pred_region
      %s781 = ssub.s32 128, 128
      %782 = vsyncadd [#allocation4], %s781
      %s784 = sshll.u32 [#allocation14], 4
      %s785 = int_to_ptr.vmem [resolvable:$true] %s784
      %787 = dma.vmem_to_hbm [thread:$0]  %s785, 128, %s7, [#allocation4]
    $region61: #{tpu_custom_call.1} parent=1 // pred_fallthru
      _
    // Predicated region
    $region62: #{tpu_custom_call.1} parent=1 // pred_check
      _
    $region63: #{tpu_custom_call.1} parent=1 // pred_check_branch
      %789 = sbr.rel (0) target = $region65
    $region64: #{tpu_custom_call.1} parent=1 // pred_region
      %790 = dma.done [#allocation4], 128
    $region65: #{tpu_custom_call.1} parent=1 // pred_fallthru
      _
    %791 = vsyncpa [#allocation3], 1
    %792 = vsyncpa [#allocation6], 1
    %793 = vsyncpa [#allocation9], 1
    %794 = vsyncpa [#allocation12], 1
    %795 = vsyncpa [#allocation4], 1

</llo_original>
